<compile_context>
chip_gen: v7x
topology: tpu7x:2x2x1
jax: 0.10.0
libtpu: 0.0.40
codegen_flags: <defaults>
</compile_context>

<pallas_src>
import functools

import numpy as np

import jax
import jax.numpy as jnp
from jax import lax
from jax.experimental import pallas as pl
from jax.experimental.pallas import tpu as pltpu

EPS = 1e-5


# ------------------------------ Pallas kernel ------------------------------ #

def _bottleneck_kernel(xp_ref, xs_ref, w1_ref, b1_ref, w2_ref, b2_ref,
                       wcat_ref, bcat_ref, o_ref):
    """Fully fused packed-bottleneck forward (3 MXU matmuls total).

    Layouts (M = N*Ho*Wo = 128 sits on the lane dimension everywhere):
      xp_ref  : (9*Cin, M)    bf16  3x3 taps of zero-padded input, tap-major rows
      xs_ref  : (Cin, M)      f32   stride-subsampled input (shortcut path)
      w1_ref  : (9*C1, 9*Cin) bf16  kron(I9, conv1+bn1-folded block-diag weight)
      b1_ref  : (9*C1, 1)     f32   conv1+bn1 folded bias, tiled per tap
      w2_ref  : (C2, 9*C1)    bf16  conv2+bn2 folded weight, tap-major columns
      b2_ref  : (C2, M)       f32   conv2+bn2 bias incl. static padding correction
      wcat_ref: (C3, C2+Cin)  bf16  [conv3+bn3 | shortcut conv+bn] folded weights
      bcat_ref: (C3, 1)       f32   b3 + b_shortcut
      o_ref   : (C3, M)       bf16
    """
    # conv1(1x1)+bn1+relu for all 9 taps in ONE block-diagonal matmul.
    h = jnp.dot(w1_ref[...], xp_ref[...], preferred_element_type=jnp.float32)
    h = jnp.maximum(h + b1_ref[...], 0.0)

    # conv2(3x3,stride)+bn2+relu as ONE matmul over the tap-major axis; the
    # zero-padding correction lives in b2 (dropout_rate=0.0 -> identity).
    out2 = jnp.dot(w2_ref[...], h.astype(w2_ref.dtype),
                   preferred_element_type=jnp.float32)
    out2 = jnp.maximum(out2 + b2_ref[...], 0.0)

    # conv3+bn3 + shortcut conv+bn + residual add fused into ONE matmul on the
    # concatenated [out2; xs] RHS, then the final relu.
    rhs = jnp.concatenate([out2, xs_ref[...]], axis=0).astype(wcat_ref.dtype)
    y = jnp.dot(wcat_ref[...], rhs, preferred_element_type=jnp.float32)
    o_ref[...] = jnp.maximum(y + bcat_ref[...], 0.0).astype(o_ref.dtype)


# ------------------------------ JAX glue ----------------------------------- #

def _fold_conv_bn(w_oihw, conv_bias, bn, groups, eps=EPS):
    """Grouped OIHW conv + eval-mode BN -> (kh*kw, Cout, Cin) dense
    block-diagonal weight with the BN scale folded in, plus a (Cout,1) bias."""
    bw, bb, bm, bv = bn
    scale = bw / jnp.sqrt(bv + eps)                          # (Cout,)
    cout, cin_g, kh, kw = w_oihw.shape
    cout_g, cin = cout // groups, cin_g * groups
    wg = w_oihw.reshape(groups, cout_g, cin_g, kh, kw).transpose(3, 4, 0, 1, 2)
    wg = wg.reshape(kh * kw, groups, cout_g, cin_g)
    wd = jnp.zeros((kh * kw, cout, cin), w_oihw.dtype)
    for g in range(groups):
        wd = wd.at[:, g * cout_g:(g + 1) * cout_g,
                   g * cin_g:(g + 1) * cin_g].set(wg[:, g])
    wf = wd * scale[None, :, None]
    bf = bb + (conv_bias - bm) * scale
    return wf, bf.reshape(cout, 1)


@functools.partial(jax.jit, static_argnames=("stride", "groups"))
def bottleneck_forward(x_nchw, P, *, stride, groups):
    """Packed _Bottleneck forward. x_nchw: (N, in_planes*alpha, H, W) f32 NCHW."""
    x = x_nchw.astype(jnp.float32)
    N, C, H, W = x.shape
    Ho = (H + 2 - 3) // stride + 1
    Wo = (W + 2 - 3) // stride + 1
    M = N * Ho * Wo

    # Fold weights (block-diagonal groups, eval-mode BN scale/bias) at trace
    # time.  For inference with static weights this whole block can be hoisted
    # out of the per-call jit.
    w1f, b1f = _fold_conv_bn(P["w1"], P["cb1"], P["bn1"], groups)
    w2f, b2f = _fold_conv_bn(P["w2"], P["cb2"], P["bn2"], groups)
    w3f, b3f = _fold_conv_bn(P["w3"], P["cb3"], P["bn3"], groups)
    wsf, bsf = _fold_conv_bn(P["ws"], P["cbs"], P["bns"], groups)
    c1, c2, c3 = w1f.shape[1], w2f.shape[1], w3f.shape[1]

    # conv1 collapsed over the 9 taps: block-diagonal kron(I9, w1), tiled bias.
    w1bd = jnp.kron(jnp.eye(9, dtype=w1f.dtype), w1f[0]).astype(jnp.bfloat16)
    b1t = jnp.tile(b1f, (9, 1))                                       # (9*c1, 1)
    # conv2 weight with tap-major columns: (c2, 9*c1).
    w2tap = w2f.transpose(1, 0, 2).reshape(c2, 9 * c1).astype(jnp.bfloat16)

    # Static padding correction folded into the conv2 bias: at padded tap
    # positions conv1 yields relu(b1) instead of 0, so subtract its conv2
    # contribution.  Uses the same bf16-rounded operands as the kernel.
    mpad = np.pad(np.ones((H, W), np.float32), 1)
    h_pad = jnp.maximum(b1f, 0.0).astype(jnp.bfloat16)                # (c1, 1)
    b2eff = jnp.broadcast_to(b2f, (c2, M))
    tap_ij = [(i, j) for i in range(3) for j in range(3)]
    for t, (i, j) in enumerate(tap_ij):
        m = mpad[i:i + stride * (Ho - 1) + 1:stride,
                 j:j + stride * (Wo - 1) + 1:stride]                  # (Ho, Wo)
        invalid = np.broadcast_to((1.0 - m).reshape(1, -1),
                                  (N, Ho * Wo)).reshape(1, M)
        corr = jnp.dot(w2f[t].astype(jnp.bfloat16), h_pad,
                       preferred_element_type=jnp.float32)            # (c2, 1)
        b2eff = b2eff - corr * invalid

    # conv3 + shortcut fused: concatenated weight and pre-summed bias.
    wcat = jnp.concatenate([w3f[0], wsf[0]], axis=1).astype(jnp.bfloat16)
    bcat = b3f + bsf                                                   # (c3, 1)

    # Input gather: one transpose to channel-major, 9 strided slices, one concat.
    xt = x.transpose(1, 0, 2, 3)                                       # (C,N,H,W)
    xpad = jnp.pad(xt, ((0, 0), (0, 0), (1, 1), (1, 1)))
    taps = [xpad[:, :, i:i + stride * (Ho - 1) + 1:stride,
                 j:j + stride * (Wo - 1) + 1:stride].reshape(C, M)
            for (i, j) in tap_ij]
    xp = jnp.concatenate(taps, axis=0).astype(jnp.bfloat16)            # (9C, M)
    xs = xt[:, :, :stride * (Ho - 1) + 1:stride,
            :stride * (Wo - 1) + 1:stride].reshape(C, M)               # (C, M)

    out_cm = pl.pallas_call(
        _bottleneck_kernel,
        out_shape=jax.ShapeDtypeStruct((c3, M), jnp.bfloat16),
        in_specs=[pl.BlockSpec(memory_space=pltpu.MemorySpace.VMEM)] * 8,
        out_specs=pl.BlockSpec(memory_space=pltpu.MemorySpace.VMEM),
    )(xp, xs, w1bd, b1t, w2tap, b2eff, wcat, bcat)

    # (Cout, N*Ho*Wo) -> NCHW (keep channel-major and drop this if the
    # downstream consumer accepts (Cout, M)).
    return out_cm.reshape(c3, N, Ho, Wo).transpose(1, 0, 2, 3)


# --------------------------- pure-JAX reference ----------------------------- #

def reference_forward(x, P, *, stride, groups, eps=EPS):
    def conv(x, w, b, s, pad, g):
        y = lax.conv_general_dilated(
            x, w, window_strides=(s, s), padding=[(pad, pad)] * 2,
            dimension_numbers=("NCHW", "OIHW", "NCHW"), feature_group_count=g,
            precision=lax.Precision.HIGHEST)
        return y + b[None, :, None, None]

    def bn(x, p):
        w, b, m, v = p
        sc = (w / jnp.sqrt(v + eps))[None, :, None, None]
        return (x - m[None, :, None, None]) * sc + b[None, :, None, None]

    out = jax.nn.relu(bn(conv(x, P["w1"], P["cb1"], 1, 0, groups), P["bn1"]))
    out = jax.nn.relu(bn(conv(out, P["w2"], P["cb2"], stride, 1, groups), P["bn2"]))
    out = bn(conv(out, P["w3"], P["cb3"], 1, 0, groups), P["bn3"])
    sc = bn(conv(x, P["ws"], P["cbs"], stride, 0, groups), P["bns"])
    return jax.nn.relu(out + sc)


# --------------------------------- main ------------------------------------- #

def _init_params(key):
    ks = jax.random.split(key, 16)

    def w(k, shape, scale=0.2):
        return scale * jax.random.normal(k, shape, jnp.float32)

    def bn(k, c):
        k1, k2, k3, k4 = jax.random.split(k, 4)
        return (1.0 + 0.1 * jax.random.normal(k1, (c,), jnp.float32),   # weight
                0.1 * jax.random.normal(k2, (c,), jnp.float32),         # bias
                0.1 * jax.random.normal(k3, (c,), jnp.float32),         # running_mean
                0.5 + jax.random.uniform(k4, (c,), jnp.float32))        # running_var

    return {
        "w1": w(ks[0], (8, 4, 1, 1)),  "cb1": w(ks[1], (8,), 0.05),  "bn1": bn(ks[2], 8),
        "w2": w(ks[3], (8, 4, 3, 3)),  "cb2": w(ks[4], (8,), 0.05),  "bn2": bn(ks[5], 8),
        "w3": w(ks[6], (32, 4, 1, 1)), "cb3": w(ks[7], (32,), 0.05), "bn3": bn(ks[8], 32),
        "ws": w(ks[9], (32, 4, 1, 1)), "cbs": w(ks[10], (32,), 0.05), "bns": bn(ks[11], 32),
    }


if __name__ == "__main__":
    key = jax.random.PRNGKey(0)
    kx, kp = jax.random.split(key)

    # Block input: (N, in_planes*alpha, H, W) = (2, 8, 16, 16), NCHW.
    x = jax.random.normal(kx, (2, 8, 16, 16), jnp.float32)
    params = _init_params(kp)

    stride, groups = 2, 2   # packed groups = num_estimators * gamma * groups = 2

    out = jax.block_until_ready(
        bottleneck_forward(x, params, stride=stride, groups=groups))
    ref = jax.block_until_ready(
        reference_forward(x, params, stride=stride, groups=groups))

    assert out.shape == (2, 32, 8, 8), out.shape
    # Kernel uses bf16 MXU operands (f32 accumulation) and a bf16 output store
    # vs. the f32 HIGHEST-precision reference; tolerance sized for that.
    err = float(jnp.abs(out.astype(jnp.float32) - ref).max())
    assert jnp.allclose(out.astype(jnp.float32), ref, atol=7.5e-2, rtol=5e-2), err

    print("KERNEL_OK")
</pallas_src>

<mosaic_0001>
module attributes {stable_mosaic.version = 11 : i64} {
  func.func @_bottleneck_kernel(%arg0: memref<72x128xbf16, #tpu.memory_space<vmem>>, %arg1: memref<8x128xf32, #tpu.memory_space<vmem>>, %arg2: memref<72x72xbf16, #tpu.memory_space<vmem>>, %arg3: memref<72x1xf32, #tpu.memory_space<vmem>>, %arg4: memref<8x72xbf16, #tpu.memory_space<vmem>>, %arg5: memref<8x128xf32, #tpu.memory_space<vmem>>, %arg6: memref<32x16xbf16, #tpu.memory_space<vmem>>, %arg7: memref<32x1xf32, #tpu.memory_space<vmem>>, %arg8: memref<32x128xbf16, #tpu.memory_space<vmem>>) attributes {dimension_semantics = [], scalar_prefetch = 0 : i64, scratch_operands = 0 : i64, tpu.core_type = #tpu.core_type<tc>} {
    %c0 = arith.constant 0 : index
    %c0_0 = arith.constant 0 : index
    %0 = vector.load %arg2[%c0, %c0_0] : memref<72x72xbf16, #tpu.memory_space<vmem>>, vector<72x72xbf16>
    %c0_1 = arith.constant 0 : index
    %c0_2 = arith.constant 0 : index
    %1 = vector.load %arg0[%c0_1, %c0_2] : memref<72x128xbf16, #tpu.memory_space<vmem>>, vector<72x128xbf16>
    %cst = arith.constant dense<0.000000e+00> : vector<72x128xf32>
    %2 = tpu.matmul %0, %1, %cst {dimension_numbers = #tpu.dot_dimension_numbers<[1], [0], [0], [1], [0, 0, 1, 1], [], []>} : vector<72x72xbf16>, vector<72x128xbf16>, vector<72x128xf32> -> vector<72x128xf32>
    %c0_3 = arith.constant 0 : index
    %c0_4 = arith.constant 0 : index
    %3 = vector.load %arg3[%c0_3, %c0_4] : memref<72x1xf32, #tpu.memory_space<vmem>>, vector<72x1xf32>
    %4 = vector.broadcast %3 : vector<72x1xf32> to vector<72x128xf32>
    %5 = arith.addf %2, %4 : vector<72x128xf32>
    %cst_5 = arith.constant 0.000000e+00 : f32
    %6 = vector.broadcast %cst_5 : f32 to vector<72x128xf32>
    %7 = arith.maximumf %5, %6 : vector<72x128xf32>
    %c0_6 = arith.constant 0 : index
    %c0_7 = arith.constant 0 : index
    %8 = vector.load %arg4[%c0_6, %c0_7] : memref<8x72xbf16, #tpu.memory_space<vmem>>, vector<8x72xbf16>
    %9 = arith.truncf %7 : vector<72x128xf32> to vector<72x128xbf16>
    %cst_8 = arith.constant dense<0.000000e+00> : vector<8x128xf32>
    %10 = tpu.matmul %8, %9, %cst_8 {dimension_numbers = #tpu.dot_dimension_numbers<[1], [0], [0], [1], [0, 0, 1, 1], [], []>} : vector<8x72xbf16>, vector<72x128xbf16>, vector<8x128xf32> -> vector<8x128xf32>
    %c0_9 = arith.constant 0 : index
    %c0_10 = arith.constant 0 : index
    %11 = vector.load %arg5[%c0_9, %c0_10] : memref<8x128xf32, #tpu.memory_space<vmem>>, vector<8x128xf32>
    %12 = arith.addf %10, %11 : vector<8x128xf32>
    %cst_11 = arith.constant 0.000000e+00 : f32
    %13 = vector.broadcast %cst_11 : f32 to vector<8x128xf32>
    %14 = arith.maximumf %12, %13 : vector<8x128xf32>
    %c0_12 = arith.constant 0 : index
    %c0_13 = arith.constant 0 : index
    %15 = vector.load %arg1[%c0_12, %c0_13] : memref<8x128xf32, #tpu.memory_space<vmem>>, vector<8x128xf32>
    %16 = tpu.concatenate %14, %15 in 0 : vector<8x128xf32>, vector<8x128xf32> -> vector<16x128xf32>
    %17 = arith.truncf %16 : vector<16x128xf32> to vector<16x128xbf16>
    %c0_14 = arith.constant 0 : index
    %c0_15 = arith.constant 0 : index
    %18 = vector.load %arg6[%c0_14, %c0_15] : memref<32x16xbf16, #tpu.memory_space<vmem>>, vector<32x16xbf16>
    %cst_16 = arith.constant dense<0.000000e+00> : vector<32x128xf32>
    %19 = tpu.matmul %18, %17, %cst_16 {dimension_numbers = #tpu.dot_dimension_numbers<[1], [0], [0], [1], [0, 0, 1, 1], [], []>} : vector<32x16xbf16>, vector<16x128xbf16>, vector<32x128xf32> -> vector<32x128xf32>
    %c0_17 = arith.constant 0 : index
    %c0_18 = arith.constant 0 : index
    %20 = vector.load %arg7[%c0_17, %c0_18] : memref<32x1xf32, #tpu.memory_space<vmem>>, vector<32x1xf32>
    %21 = vector.broadcast %20 : vector<32x1xf32> to vector<32x128xf32>
    %22 = arith.addf %19, %21 : vector<32x128xf32>
    %cst_19 = arith.constant 0.000000e+00 : f32
    %23 = vector.broadcast %cst_19 : f32 to vector<32x128xf32>
    %24 = arith.maximumf %22, %23 : vector<32x128xf32>
    %25 = arith.truncf %24 : vector<32x128xf32> to vector<32x128xbf16>
    %c0_20 = arith.constant 0 : index
    %c0_21 = arith.constant 0 : index
    %26 = vector.load %arg8[%c0_20, %c0_21] : memref<32x128xbf16, #tpu.memory_space<vmem>>, vector<32x128xbf16>
    tpu.vector_store %arg8[%c0_20, %c0_21], %25 {strides = array<i32>} : memref<32x128xbf16, #tpu.memory_space<vmem>>, vector<32x128xbf16>,
    return
  }
}

</mosaic_0001>

<llo_original>
// kernel: bottleneck_forward.1
$region0: #{bottleneck_forward.1}
  #allocation0 [shape = 'u32[]', space=smem, size = 0x4, offset = 0x4, fixed_abs, tag = 'smem constant byte address 0x4 - core index']
  #allocation1 [shape = 'u32[144,128]{1,0:T(1,128)}', space=vmem, size = 0x12000, scoped, tag = 'internal scratch']
  %s0 = inlined_call_operand.vmem [shape: bf16[72,128], index: 0, kind: input, shape index: {}]
  %s1 = inlined_call_operand.vmem [shape: f32[8,128], index: 1, kind: input, shape index: {}]
  %s2 = inlined_call_operand.vmem [shape: bf16[72,72], index: 2, kind: input, shape index: {}]
  %s3 = inlined_call_operand.vmem [shape: f32[72,1], index: 3, kind: input, shape index: {}]
  %s4 = inlined_call_operand.vmem [shape: bf16[8,72], index: 4, kind: input, shape index: {}]
  %s5 = inlined_call_operand.vmem [shape: f32[8,128], index: 5, kind: input, shape index: {}]
  %s6 = inlined_call_operand.vmem [shape: bf16[32,16], index: 6, kind: input, shape index: {}]
  %s7 = inlined_call_operand.vmem [shape: f32[32,1], index: 7, kind: input, shape index: {}]
  %s8 = inlined_call_operand.vmem [shape: bf16[32,128], index: 8, kind: output, shape index: {}]
  %s9 = sld [smem:[#allocation0]]
  $region42: #{bottleneck_forward.1} parent=0
    _
  %s11 = ssub.s32 1, %s9
  %s12 = scalar_select 0, %s11, %s9
  // Predicated region
  $region2: #{bottleneck_forward.1} parent=0 // pred_check
    _
  $region3: #{bottleneck_forward.1} parent=0 // pred_check_branch
    %14 = sbr.rel (0) target = $region5
  $region4: #{bottleneck_forward.1} parent=0 // pred_region
    _
  $region5: #{bottleneck_forward.1} parent=0 // pred_fallthru
    _
  // Predicated region
  $region6: #{bottleneck_forward.1} parent=0 // pred_check
    _
  $region7: #{bottleneck_forward.1} parent=0 // pred_check_branch
    %16 = sbr.rel (0) target = $region9
  $region8: #{bottleneck_forward.1} parent=0 // pred_region
    _
  $region9: #{bottleneck_forward.1} parent=0 // pred_fallthru
    _
  // Predicated region
  $region10: #{bottleneck_forward.1} parent=0 // pred_check
    _
  $region11: #{bottleneck_forward.1} parent=0 // pred_check_branch
    %18 = sbr.rel (0) target = $region13
  $region12: #{bottleneck_forward.1} parent=0 // pred_region
    _
  $region13: #{bottleneck_forward.1} parent=0 // pred_fallthru
    _
  // Predicated region
  $region14: #{bottleneck_forward.1} parent=0 // pred_check
    _
  $region15: #{bottleneck_forward.1} parent=0 // pred_check_branch
    %20 = sbr.rel (0) target = $region17
  $region16: #{bottleneck_forward.1} parent=0 // pred_region
    _
  $region17: #{bottleneck_forward.1} parent=0 // pred_fallthru
    _
  // Predicated region
  $region18: #{bottleneck_forward.1} parent=0 // pred_check
    _
  $region19: #{bottleneck_forward.1} parent=0 // pred_check_branch
    %22 = sbr.rel (0) target = $region21
  $region20: #{bottleneck_forward.1} parent=0 // pred_region
    _
  $region21: #{bottleneck_forward.1} parent=0 // pred_fallthru
    _
  // Predicated region
  $region22: #{bottleneck_forward.1} parent=0 // pred_check
    _
  $region23: #{bottleneck_forward.1} parent=0 // pred_check_branch
    %24 = sbr.rel (0) target = $region25
  $region24: #{bottleneck_forward.1} parent=0 // pred_region
    _
  $region25: #{bottleneck_forward.1} parent=0 // pred_fallthru
    _
  // Predicated region
  $region26: #{bottleneck_forward.1} parent=0 // pred_check
    _
  $region27: #{bottleneck_forward.1} parent=0 // pred_check_branch
    %26 = sbr.rel (0) target = $region29
  $region28: #{bottleneck_forward.1} parent=0 // pred_region
    _
  $region29: #{bottleneck_forward.1} parent=0 // pred_fallthru
    _
  // Predicated region
  $region30: #{bottleneck_forward.1} parent=0 // pred_check
    _
  $region31: #{bottleneck_forward.1} parent=0 // pred_check_branch
    %28 = sbr.rel (0) target = $region33
  $region32: #{bottleneck_forward.1} parent=0 // pred_region
    _
  $region33: #{bottleneck_forward.1} parent=0 // pred_fallthru
    _
  %v30 = vld [vmem:[%s2] sm:$0xf]
  %v31 = vld [vmem:[%s2 + $0x4] sm:$0xf]
  %v32 = vld [vmem:[%s2 + $0x8] sm:$0xf]
  %v33 = vld [vmem:[%s2 + $0xc] sm:$0xf]
  %v34 = vld [vmem:[%s2 + $0x10] sm:$0xf]
  %v35 = vld [vmem:[%s2 + $0x14] sm:$0xf]
  %v36 = vld [vmem:[%s2 + $0x18] sm:$0xf]
  %v37 = vld [vmem:[%s2 + $0x1c] sm:$0xf]
  %v38 = vld [vmem:[%s2 + $0x20] sm:$0xf]
  %v39 = vld [vmem:[%s0] sm:$0xf]
  %v40 = vld [vmem:[%s0 + $0x4] sm:$0xf]
  %v41 = vld [vmem:[%s0 + $0x8] sm:$0xf]
  %v42 = vld [vmem:[%s0 + $0xc] sm:$0xf]
  %v43 = vld [vmem:[%s0 + $0x10] sm:$0xf]
  %v44 = vld [vmem:[%s0 + $0x14] sm:$0xf]
  %v45 = vld [vmem:[%s0 + $0x18] sm:$0xf]
  %v46 = vld [vmem:[%s0 + $0x1c] sm:$0xf]
  %v47 = vld [vmem:[%s0 + $0x20] sm:$0xf]
  %v48 = vld [vmem:[%s3] sm:$0xff]
  %v49 = vld [vmem:[%s3 + $0x8] sm:$0xff]
  %v50 = vld [vmem:[%s3 + $0x10] sm:$0xff]
  %v51 = vld [vmem:[%s3 + $0x18] sm:$0xff]
  %v52 = vld [vmem:[%s3 + $0x20] sm:$0xff]
  %v53 = vld [vmem:[%s3 + $0x28] sm:$0xff]
  %v54 = vld [vmem:[%s3 + $0x30] sm:$0xff]
  %v55 = vld [vmem:[%s3 + $0x38] sm:$0xff]
  %v56 = vld [vmem:[%s3 + $0x40] sm:$0xff]
  %58 = vset.pattern.permute.xlu0 0
  %59 = vperm.xlu0 %58, %v48
  %v60 = vpop.permute.xlu0 %59
  %63 = vset.pattern.permute.xlu0 0
  %64 = vperm.xlu0 %63, %v49
  %v65 = vpop.permute.xlu0 %64
  %68 = vset.pattern.permute.xlu0 0
  %69 = vperm.xlu0 %68, %v50
  %v70 = vpop.permute.xlu0 %69
  %73 = vset.pattern.permute.xlu0 0
  %74 = vperm.xlu0 %73, %v51
  %v75 = vpop.permute.xlu0 %74
  %78 = vset.pattern.permute.xlu0 0
  %79 = vperm.xlu0 %78, %v52
  %v80 = vpop.permute.xlu0 %79
  %83 = vset.pattern.permute.xlu0 0
  %84 = vperm.xlu0 %83, %v53
  %v85 = vpop.permute.xlu0 %84
  %88 = vset.pattern.permute.xlu0 0
  %89 = vperm.xlu0 %88, %v54
  %v90 = vpop.permute.xlu0 %89
  %93 = vset.pattern.permute.xlu0 0
  %94 = vperm.xlu0 %93, %v55
  %v95 = vpop.permute.xlu0 %94
  %98 = vset.pattern.permute.xlu0 0
  %99 = vperm.xlu0 %98, %v56
  %v100 = vpop.permute.xlu0 %99
  %v111 = vunpack.c.l.b16 %v30
  %v112 = vunpack.c.l.b16 %v31
  %v113 = vunpack.c.l.b16 %v32
  %v114 = vunpack.c.l.b16 %v33
  %v115 = vunpack.c.l.b16 %v34
  %v116 = vunpack.c.l.b16 %v35
  %v117 = vunpack.c.l.b16 %v36
  %v118 = vunpack.c.l.b16 %v37
  %v119 = vunpack.c.l.b16 %v38
  %v120 = vpack.c.b16 %v112, %v111
  %v121 = vpack.c.b16 %v114, %v113
  %v122 = vpack.c.b16 %v116, %v115
  %v123 = vpack.c.b16 %v118, %v117
  %v124 = vpack.c.b16 %v119, %v119
  %v134 = vunpack.c.l.b16 %v39
  %v135 = vunpack.c.l.b16 %v40
  %v136 = vunpack.c.l.b16 %v41
  %v137 = vunpack.c.l.b16 %v42
  %v138 = vunpack.c.l.b16 %v43
  %v139 = vunpack.c.l.b16 %v44
  %v140 = vunpack.c.l.b16 %v45
  %v141 = vunpack.c.l.b16 %v46
  %v142 = vunpack.c.l.b16 %v47
  %v143 = vpack.c.b16 %v135, %v134
  %v144 = vpack.c.b16 %v137, %v136
  %v145 = vpack.c.b16 %v139, %v138
  %v146 = vpack.c.b16 %v141, %v140
  %v147 = vpack.c.b16 %v142, %v142
  %vm152 = vcmask 588800
  %v154 = vsel %vm152, %v120, 0
  %v157 = vsel %vm152, %v121, 0
  %v160 = vsel %vm152, %v122, 0
  %v163 = vsel %vm152, %v123, 0
  %v166 = vsel %vm152, %v124, 0
  %vm168 = vcmask 1043456
  %v170 = vsel %vm168, %v147, 0
  %172 = vmatprep.subr.bf16.mxu0 0
  %173 = vmatpush1.bf16.msra.mxu0 %v143
  %174 = vmatprep.subr.bf16.mxu0 0
  %175 = vmatpush1.bf16.msra.mxu0 %v144
  %176 = vmatprep.subr.bf16.mxu0 0
  %177 = vmatpush1.bf16.msra.mxu0 %v145
  %178 = vmatprep.subr.bf16.mxu0 0
  %179 = vmatpush1.bf16.msra.mxu0 %v146
  %180 = vmatprep.subr.bf16.mxu0 0
  %181 = vmatpush1.bf16.msra.mxu0 %v170
  %182 = vmatprep.subr.bf16.mxu0 0
  %183 = vmatpush1.bf16.msra.mxu0 0
  %184 = vmatprep.subr.bf16.mxu0 0
  %185 = vmatpush1.bf16.msra.mxu0 0
  %186 = vmatprep.subr.bf16.mxu0 0
  %187 = vmatpush1.bf16.msra.mxu0 0
  %188 = vmatprep.subr.bf16.mxu0 0
  %189 = vmatpush1.bf16.msra.mxu0 0
  %190 = vmatprep.subr.bf16.mxu0 0
  %191 = vmatpush1.bf16.msra.mxu0 0
  %192 = vmatprep.subr.bf16.mxu0 0
  %193 = vmatpush1.bf16.msra.mxu0 0
  %194 = vmatprep.subr.bf16.mxu0 0
  %195 = vmatpush1.bf16.msra.mxu0 0
  %196 = vmatprep.subr.bf16.mxu0 0
  %197 = vmatpush1.bf16.msra.mxu0 0
  %198 = vmatprep.subr.bf16.mxu0 0
  %199 = vmatpush1.bf16.msra.mxu0 0
  %200 = vmatprep.subr.bf16.mxu0 0
  %201 = vmatpush1.bf16.msra.mxu0 0
  %202 = vmatprep.subr.bf16.mxu0 0
  %203 = vmatpush1.bf16.msra.mxu0 0
  %204 = vmatprep.mubr.bf16.mxu0 0
  %205 = vmatmul.mubr.bf16.gmra.mrb[0].mxu0 %v154
  %v206 = vpop.f32.mrb[0].mxu0
  %v207 = vadd.f32 %v60, %v206
  %v208 = vpop.f32.mrb[0].mxu0
  %v209 = vpop.f32.mrb[0].mxu0
  %v210 = vadd.f32 %v65, %v209
  %v211 = vpop.f32.mrb[0].mxu0
  %212 = vmatprep.mubr.bf16.mxu0 0
  %213 = vmatmul.mubr.bf16.gmra.mrb[0].mxu0 %v157
  %v214 = vpop.f32.mrb[0].mxu0
  %v215 = vadd.f32 %v70, %v214
  %v216 = vpop.f32.mrb[0].mxu0
  %v217 = vpop.f32.mrb[0].mxu0
  %v218 = vadd.f32 %v75, %v217
  %v219 = vpop.f32.mrb[0].mxu0
  %220 = vmatprep.mubr.bf16.mxu0 0
  %221 = vmatmul.mubr.bf16.gmra.mrb[0].mxu0 %v160
  %v222 = vpop.f32.mrb[0].mxu0
  %v223 = vadd.f32 %v80, %v222
  %v224 = vpop.f32.mrb[0].mxu0
  %v225 = vpop.f32.mrb[0].mxu0
  %v226 = vadd.f32 %v85, %v225
  %v227 = vpop.f32.mrb[0].mxu0
  %228 = vmatprep.mubr.bf16.mxu0 0
  %229 = vmatmul.mubr.bf16.gmra.mrb[0].mxu0 %v163
  %v230 = vpop.f32.mrb[0].mxu0
  %v231 = vadd.f32 %v90, %v230
  %v232 = vpop.f32.mrb[0].mxu0
  %v233 = vpop.f32.mrb[0].mxu0
  %v234 = vadd.f32 %v95, %v233
  %v235 = vpop.f32.mrb[0].mxu0
  %236 = vmatprep.mubr.bf16.mxu0 0
  %237 = vmatmul.mubr.bf16.gmra.mrb[0].mxu0 %v166
  %v238 = vpop.f32.mrb[0].mxu0
  %v239 = vadd.f32 %v100, %v238
  %v240 = vpop.f32.mrb[0].mxu0
  %v241 = vpop.f32.mrb[0].mxu0
  %v242 = vpop.f32.mrb[0].mxu0
  %243 = vdwg.mxu0
  %v244 = vmax.f32 %v207, 0.0
  %v245 = vmax.f32 %v210, 0.0
  %v246 = vmax.f32 %v215, 0.0
  %v247 = vmax.f32 %v218, 0.0
  %v248 = vmax.f32 %v223, 0.0
  %v249 = vmax.f32 %v226, 0.0
  %v250 = vmax.f32 %v231, 0.0
  %v251 = vmax.f32 %v234, 0.0
  %v252 = vmax.f32 %v239, 0.0
  %v253 = vld [vmem:[%s4] sm:$0xf]
  %v254 = vpack.c.bf16 %v245, %v244
  %v255 = vpack.c.bf16 %v247, %v246
  %v256 = vpack.c.bf16 %v249, %v248
  %v257 = vpack.c.bf16 %v251, %v250
  %v258 = vpack.c.bf16 %v252, %v252
  %v259 = vld [vmem:[%s5] sm:$0xff]
  %v261 = vsel %vm152, %v253, 0
  %v264 = vsel %vm168, %v258, 0
  %266 = vmatprep.subr.bf16.mxu0 0
  %267 = vmatpush1.bf16.msra.mxu0 %v254
  %268 = vmatprep.subr.bf16.mxu0 0
  %269 = vmatpush1.bf16.msra.mxu0 %v255
  %270 = vmatprep.subr.bf16.mxu0 0
  %271 = vmatpush1.bf16.msra.mxu0 %v256
  %272 = vmatprep.subr.bf16.mxu0 0
  %273 = vmatpush1.bf16.msra.mxu0 %v257
  %274 = vmatprep.subr.bf16.mxu0 0
  %275 = vmatpush1.bf16.msra.mxu0 %v264
  %276 = vmatprep.subr.bf16.mxu0 0
  %277 = vmatpush1.bf16.msra.mxu0 0
  %278 = vmatprep.subr.bf16.mxu0 0
  %279 = vmatpush1.bf16.msra.mxu0 0
  %280 = vmatprep.subr.bf16.mxu0 0
  %281 = vmatpush1.bf16.msra.mxu0 0
  %282 = vmatprep.subr.bf16.mxu0 0
  %283 = vmatpush1.bf16.msra.mxu0 0
  %284 = vmatprep.subr.bf16.mxu0 0
  %285 = vmatpush1.bf16.msra.mxu0 0
  %286 = vmatprep.subr.bf16.mxu0 0
  %287 = vmatpush1.bf16.msra.mxu0 0
  %288 = vmatprep.subr.bf16.mxu0 0
  %289 = vmatpush1.bf16.msra.mxu0 0
  %290 = vmatprep.subr.bf16.mxu0 0
  %291 = vmatpush1.bf16.msra.mxu0 0
  %292 = vmatprep.subr.bf16.mxu0 0
  %293 = vmatpush1.bf16.msra.mxu0 0
  %294 = vmatprep.subr.bf16.mxu0 0
  %295 = vmatpush1.bf16.msra.mxu0 0
  %296 = vmatprep.subr.bf16.mxu0 0
  %297 = vmatpush1.bf16.msra.mxu0 0
  %298 = vmatprep.mubr.bf16.mxu0 0
  %299 = vmatmul.mubr.bf16.gmra.mrb[0].mxu0 %v261
  %v300 = vpop.f32.mrb[0].mxu0
  %v301 = vadd.f32 %v259, %v300
  %v302 = vpop.f32.mrb[0].mxu0
  %v303 = vpop.f32.mrb[0].mxu0
  %v304 = vpop.f32.mrb[0].mxu0
  %305 = vdwg.mxu0
  %v306 = vmax.f32 %v301, 0.0
  %v307 = vld [vmem:[%s1] sm:$0xff]
  %v308 = vpack.c.bf16 %v307, %v306
  %v309 = vld [vmem:[%s6] sm:$0xf]
  %v310 = vld [vmem:[%s6 + $0x4] sm:$0xf]
  %v311 = vld [vmem:[%s6 + $0x8] sm:$0xf]
  %v312 = vld [vmem:[%s6 + $0xc] sm:$0xf]
  %v313 = vld [vmem:[%s7] sm:$0xff]
  %v314 = vld [vmem:[%s7 + $0x8] sm:$0xff]
  %v315 = vld [vmem:[%s7 + $0x10] sm:$0xff]
  %v316 = vld [vmem:[%s7 + $0x18] sm:$0xff]
  %318 = vset.pattern.permute.xlu0 0
  %319 = vperm.xlu0 %318, %v313
  %v320 = vpop.permute.xlu0 %319
  %323 = vset.pattern.permute.xlu0 0
  %324 = vperm.xlu0 %323, %v314
  %v325 = vpop.permute.xlu0 %324
  %328 = vset.pattern.permute.xlu0 0
  %329 = vperm.xlu0 %328, %v315
  %v330 = vpop.permute.xlu0 %329
  %333 = vset.pattern.permute.xlu0 0
  %334 = vperm.xlu0 %333, %v316
  %v335 = vpop.permute.xlu0 %334
  %v341 = vunpack.c.l.b16 %v309
  %v342 = vunpack.c.l.b16 %v310
  %v343 = vunpack.c.l.b16 %v311
  %v344 = vunpack.c.l.b16 %v312
  %v345 = vpack.c.b16 %v342, %v341
  %v346 = vpack.c.b16 %v344, %v343
  %vm347 = vcmask 130048
  %v349 = vsel %vm347, %v345, 0
  %v352 = vsel %vm347, %v346, 0
  %354 = vmatprep.subr.bf16.mxu0 0
  %355 = vmatpush1.bf16.msra.mxu0 %v308
  %356 = vmatprep.subr.bf16.mxu0 0
  %357 = vmatpush1.bf16.msra.mxu0 0
  %358 = vmatprep.subr.bf16.mxu0 0
  %359 = vmatpush1.bf16.msra.mxu0 0
  %360 = vmatprep.subr.bf16.mxu0 0
  %361 = vmatpush1.bf16.msra.mxu0 0
  %362 = vmatprep.subr.bf16.mxu0 0
  %363 = vmatpush1.bf16.msra.mxu0 0
  %364 = vmatprep.subr.bf16.mxu0 0
  %365 = vmatpush1.bf16.msra.mxu0 0
  %366 = vmatprep.subr.bf16.mxu0 0
  %367 = vmatpush1.bf16.msra.mxu0 0
  %368 = vmatprep.subr.bf16.mxu0 0
  %369 = vmatpush1.bf16.msra.mxu0 0
  %370 = vmatprep.subr.bf16.mxu0 0
  %371 = vmatpush1.bf16.msra.mxu0 0
  %372 = vmatprep.subr.bf16.mxu0 0
  %373 = vmatpush1.bf16.msra.mxu0 0
  %374 = vmatprep.subr.bf16.mxu0 0
  %375 = vmatpush1.bf16.msra.mxu0 0
  %376 = vmatprep.subr.bf16.mxu0 0
  %377 = vmatpush1.bf16.msra.mxu0 0
  %378 = vmatprep.subr.bf16.mxu0 0
  %379 = vmatpush1.bf16.msra.mxu0 0
  %380 = vmatprep.subr.bf16.mxu0 0
  %381 = vmatpush1.bf16.msra.mxu0 0
  %382 = vmatprep.subr.bf16.mxu0 0
  %383 = vmatpush1.bf16.msra.mxu0 0
  %384 = vmatprep.subr.bf16.mxu0 0
  %385 = vmatpush1.bf16.msra.mxu0 0
  %386 = vmatprep.mubr.bf16.mxu0 0
  %387 = vmatmul.mubr.bf16.gmra.mrb[0].mxu0 %v349
  %v388 = vpop.f32.mrb[0].mxu0
  %v389 = vadd.f32 %v320, %v388
  %v390 = vpop.f32.mrb[0].mxu0
  %v391 = vpop.f32.mrb[0].mxu0
  %v392 = vadd.f32 %v325, %v391
  %v393 = vpop.f32.mrb[0].mxu0
  %394 = vmatprep.mubr.bf16.mxu0 0
  %395 = vmatmul.mubr.bf16.gmra.mrb[0].mxu0 %v352
  %v396 = vpop.f32.mrb[0].mxu0
  %v397 = vadd.f32 %v330, %v396
  %v398 = vpop.f32.mrb[0].mxu0
  %v399 = vpop.f32.mrb[0].mxu0
  %v400 = vadd.f32 %v335, %v399
  %v401 = vpop.f32.mrb[0].mxu0
  %402 = vdwg.mxu0
  %v403 = vmax.f32 %v389, 0.0
  %v404 = vmax.f32 %v392, 0.0
  %v405 = vmax.f32 %v397, 0.0
  %v406 = vmax.f32 %v400, 0.0
  %v407 = vpack.c.bf16 %v404, %v403
  %v408 = vpack.c.bf16 %v406, %v405
  %v411 = vunpack.c.l.b16 %v407
  %v412 = vunpack.c.h.b16 %v407
  %v413 = vunpack.c.l.b16 %v408
  %v414 = vunpack.c.h.b16 %v408
  %v415 = vpack.c.b16 %v411, %v411
  %v416 = vpack.c.b16 %v412, %v412
  %v417 = vpack.c.b16 %v413, %v413
  %v418 = vpack.c.b16 %v414, %v414
  %423 = vst [vmem:[%s8] sm:$0xf] %v415
  %424 = vst [vmem:[%s8 + $0x4] sm:$0xf] %v416
  %425 = vst [vmem:[%s8 + $0x8] sm:$0xf] %v417
  %426 = vst [vmem:[%s8 + $0xc] sm:$0xf] %v418
  // Predicated region
  $region34: #{bottleneck_forward.1} parent=0 // pred_check
    _
  $region35: #{bottleneck_forward.1} parent=0 // pred_check_branch
    %428 = sbr.rel (0) target = $region37
  $region36: #{bottleneck_forward.1} parent=0 // pred_region
    _
  $region37: #{bottleneck_forward.1} parent=0 // pred_fallthru
    _
  // Predicated region
  $region38: #{bottleneck_forward.1} parent=0 // pred_check
    _
  $region39: #{bottleneck_forward.1} parent=0 // pred_check_branch
    %430 = sbr.rel (0) target = $region41
  $region40: #{bottleneck_forward.1} parent=0 // pred_region
    _
  $region41: #{bottleneck_forward.1} parent=0 // pred_fallthru
    _

</llo_original>
